<compile_context>
chip_gen: v5e
topology: v5e:2x2
jax: 0.10.0
libtpu: 0.0.40
codegen_flags: <defaults>
</compile_context>

<pallas_src>
import jax
import jax.numpy as jnp
from jax.experimental import pallas as pl
from jax.experimental.pallas import tpu as pltpu


def _round_up(x, m):
    return (x + m - 1) // m * m


def _encoder_kernel(x_ref, w1_ref, b1_ref, w2row_ref, b2sum_ref, o_ref):
    # x_ref:     (TB, D_IN)  bf16   batch tile (double-buffered by the pipeline)
    # w1_ref:    (D_IN, H)   bf16   VMEM-resident (same block every grid step)
    # b1_ref:    (1, H)      f32    VMEM-resident
    # w2row_ref: (1, H)      f32    VMEM-resident (= W2.sum(axis=-1) row vector)
    # b2sum_ref: (1, 1)      f32    SMEM scalar   (= b2.sum())
    # o_ref:     (1, 1, TB)  f32    batch mapped to lanes -> dense unmasked stores

    # compress: tanh(x @ W1 + b1) — bf16 MXU matmul, f32 accumulate, f32 tanh (EUP slot).
    z = jnp.dot(x_ref[...], w1_ref[...], preferred_element_type=jnp.float32)
    c = jnp.tanh(z + b1_ref[...])                                    # (TB, H) f32

    # Head + keepdim-sum folded into one mat-vec, computed transposed so the batch
    # dimension lands on the lane axis:  (1, H) . (TB, H)^T -> (1, TB).
    y = jax.lax.dot_general(
        w2row_ref[...], c,
        dimension_numbers=(((1,), (1,)), ((), ())),
        preferred_element_type=jnp.float32,
    ) + b2sum_ref[0, 0]                                              # (1, TB)

    o_ref[...] = y[None]                                             # (1, 1, TB)


def encoder_forward(x, w1, b1, w2, b2, *, block_b=1024):
    """_Encoder2.forward(x): synthetic model.compress_forward(x, num_source)."""
    B, d_in = x.shape
    h = w1.shape[1]

    # Algebraic fold of the linear head + lane reduction into the weights (wrapper-side, once).
    w2_row = jnp.sum(w2.astype(jnp.float32), axis=-1)[None, :]       # (1, H)
    b2_sum = jnp.sum(b2.astype(jnp.float32)).reshape(1, 1)           # (1, 1) -> SMEM scalar
    b1_f32 = b1.astype(jnp.float32).reshape(1, h)

    # bf16 inputs for the MXU's native path; accumulation stays f32 in-kernel.
    x_bf16 = x.astype(jnp.bfloat16)
    w1_bf16 = w1.astype(jnp.bfloat16)

    # Batch tiling: TB rows per grid step (lane-aligned); pad B up to a tile multiple.
    tb = min(block_b, _round_up(B, 128))
    b_pad = _round_up(B, tb)
    if b_pad != B:
        x_bf16 = jnp.pad(x_bf16, ((0, b_pad - B), (0, 0)))
    num_tiles = b_pad // tb

    # Explicit VMEM budget: double-buffered x tile + double-buffered (sublane-padded) out row
    # + resident weights, with generous headroom (safe on v7x's 64 MiB VMEM as well).
    vmem_need = (2 * tb * d_in * 2) + (2 * 8 * tb * 4) + (d_in * h * 2) + (4 * h * 4)
    vmem_limit = min(max(4 * vmem_need, 4 * 1024 * 1024), 64 * 1024 * 1024)

    cost = pl.CostEstimate(
        flops=2 * b_pad * d_in * h + 2 * b_pad * h,
        transcendentals=b_pad * h,
        bytes_accessed=(x_bf16.size * 2 + w1_bf16.size * 2
                        + (b1_f32.size + w2_row.size + 1) * 4 + b_pad * 4),
    )

    out = pl.pallas_call(
        _encoder_kernel,
        out_shape=jax.ShapeDtypeStruct((num_tiles, 1, tb), jnp.float32),
        grid_spec=pltpu.PrefetchScalarGridSpec(
            num_scalar_prefetch=0,
            grid=(num_tiles,),
            in_specs=[
                pl.BlockSpec((tb, d_in), lambda i: (i, 0)),           # x: batch-tiled
                pl.BlockSpec((d_in, h), lambda i: (0, 0)),            # W1: resident
                pl.BlockSpec((1, h), lambda i: (0, 0)),               # b1: resident
                pl.BlockSpec((1, h), lambda i: (0, 0)),               # W2 col-sum: resident
                pl.BlockSpec(memory_space=pltpu.MemorySpace.SMEM),    # b2 sum (scalar)
            ],
            out_specs=pl.BlockSpec((1, 1, tb), lambda i: (i, 0, 0)),
        ),
        compiler_params=pltpu.CompilerParams(
            dimension_semantics=("parallel",),     # batch tiles independent (megacore on v7x)
            vmem_limit_bytes=vmem_limit,
        ),
        cost_estimate=cost,
    )(x_bf16, w1_bf16, b1_f32, w2_row, b2_sum)

    return out.reshape(b_pad, 1)[:B]


def encoder_reference(x, w1, b1, w2, b2):
    # Same bf16 rounding of x / W1 as the kernel; unfolded W2 / b2 path.
    xf = x.astype(jnp.bfloat16).astype(jnp.float32)
    w1f = w1.astype(jnp.bfloat16).astype(jnp.float32)
    c = jnp.tanh(xf @ w1f + b1.astype(jnp.float32))
    res = c @ w2.astype(jnp.float32) + b2.astype(jnp.float32)
    return jnp.sum(res, axis=-1, keepdims=True)


if __name__ == "__main__":
    B, D_IN, H, D_OUT = 8, 64, 32, 16

    key = jax.random.PRNGKey(0)
    kx, kw1, kb1, kw2, kb2 = jax.random.split(key, 5)

    x = jax.random.normal(kx, (B, D_IN), dtype=jnp.float32)
    w1 = jax.random.normal(kw1, (D_IN, H), dtype=jnp.float32) * 0.1
    b1 = jax.random.normal(kb1, (1, H), dtype=jnp.float32) * 0.1
    w2 = jax.random.normal(kw2, (H, D_OUT), dtype=jnp.float32) * 0.1
    b2 = jax.random.normal(kb2, (1, D_OUT), dtype=jnp.float32) * 0.1

    out = encoder_forward(x, w1, b1, w2, b2)
    jax.block_until_ready(out)
    ref = encoder_reference(x, w1, b1, w2, b2)
    assert out.shape == (B, 1), out.shape
    assert jnp.allclose(out, ref, atol=2e-3, rtol=2e-3), (out, ref)

    # Multi-tile / padding path: batch not a multiple of the tile, grid of 3 steps.
    B2 = 300
    x2 = jax.random.normal(jax.random.PRNGKey(1), (B2, D_IN), dtype=jnp.float32)
    out2 = encoder_forward(x2, w1, b1, w2, b2, block_b=128)
    jax.block_until_ready(out2)
    ref2 = encoder_reference(x2, w1, b1, w2, b2)
    assert out2.shape == (B2, 1), out2.shape
    assert jnp.allclose(out2, ref2, atol=2e-3, rtol=2e-3), (out2, ref2)

    print("KERNEL_OK")
</pallas_src>

<mosaic_0001>
module attributes {stable_mosaic.version = 11 : i64} {
  func.func @_encoder_kernel(%arg0: i32, %arg1: memref<128x64xbf16, #tpu.memory_space<vmem>>, %arg2: memref<64x32xbf16, #tpu.memory_space<vmem>>, %arg3: memref<1x32xf32, #tpu.memory_space<vmem>>, %arg4: memref<1x32xf32, #tpu.memory_space<vmem>>, %arg5: memref<1x1xf32, #tpu.memory_space<smem>>, %arg6: memref<1x1x128xf32, #tpu.memory_space<vmem>>) attributes {dimension_semantics = [#tpu.dimension_semantics<parallel>], iteration_bounds = array<i64: 1>, scalar_prefetch = 0 : i64, scratch_operands = 0 : i64, tpu.core_type = #tpu.core_type<tc>, window_params = [{transform_indices = @transform_0, window_bounds = array<i64: 128, 64>}, {pipeline_mode = #tpu.pipeline_mode<synchronous>, transform_indices = @transform_1, window_bounds = array<i64: 64, 32>}, {pipeline_mode = #tpu.pipeline_mode<synchronous>, transform_indices = @transform_2, window_bounds = array<i64: 1, 32>}, {pipeline_mode = #tpu.pipeline_mode<synchronous>, transform_indices = @transform_3, window_bounds = array<i64: 1, 32>}, {transform_indices = @transform_4, window_bounds = array<i64: 1, 1>}, {transform_indices = @transform_5, window_bounds = array<i64: 1, 1, 128>}]} {
    %c0 = arith.constant 0 : index
    %c0_0 = arith.constant 0 : index
    %0 = vector.load %arg1[%c0, %c0_0] : memref<128x64xbf16, #tpu.memory_space<vmem>>, vector<128x64xbf16>
    %c0_1 = arith.constant 0 : index
    %c0_2 = arith.constant 0 : index
    %1 = vector.load %arg2[%c0_1, %c0_2] : memref<64x32xbf16, #tpu.memory_space<vmem>>, vector<64x32xbf16>
    %cst = arith.constant dense<0.000000e+00> : vector<128x32xf32>
    %2 = tpu.matmul %0, %1, %cst {dimension_numbers = #tpu.dot_dimension_numbers<[1], [0], [0], [1], [0, 0, 1, 1], [], []>} : vector<128x64xbf16>, vector<64x32xbf16>, vector<128x32xf32> -> vector<128x32xf32>
    %c0_3 = arith.constant 0 : index
    %c0_4 = arith.constant 0 : index
    %3 = vector.load %arg3[%c0_3, %c0_4] : memref<1x32xf32, #tpu.memory_space<vmem>>, vector<1x32xf32>
    %4 = vector.broadcast %3 : vector<1x32xf32> to vector<128x32xf32>
    %5 = arith.addf %2, %4 : vector<128x32xf32>
    %6 = math.tanh %5 : vector<128x32xf32>
    %c0_5 = arith.constant 0 : index
    %c0_6 = arith.constant 0 : index
    %7 = vector.load %arg4[%c0_5, %c0_6] : memref<1x32xf32, #tpu.memory_space<vmem>>, vector<1x32xf32>
    %cst_7 = arith.constant dense<0.000000e+00> : vector<1x128xf32>
    %8 = tpu.matmul %7, %6, %cst_7 {dimension_numbers = #tpu.dot_dimension_numbers<[1], [1], [0], [0], [0, 0, 1, 0], [], []>} : vector<1x32xf32>, vector<128x32xf32>, vector<1x128xf32> -> vector<1x128xf32>
    %c0_8 = arith.constant 0 : index
    %c0_9 = arith.constant 0 : index
    %9 = memref.load %arg5[%c0_8, %c0_9] : memref<1x1xf32, #tpu.memory_space<smem>>
    %10 = vector.broadcast %9 : f32 to vector<1x128xf32>
    %11 = arith.addf %8, %10 : vector<1x128xf32>
    %12 = vector.shape_cast %11 : vector<1x128xf32> to vector<1x1x128xf32>
    %c0_10 = arith.constant 0 : index
    %c0_11 = arith.constant 0 : index
    %c0_12 = arith.constant 0 : index
    %13 = vector.load %arg6[%c0_10, %c0_11, %c0_12] : memref<1x1x128xf32, #tpu.memory_space<vmem>>, vector<1x1x128xf32>
    tpu.vector_store %arg6[%c0_10, %c0_11, %c0_12], %12 {strides = array<i32>} : memref<1x1x128xf32, #tpu.memory_space<vmem>>, vector<1x1x128xf32>,
    return
  }
  func.func @transform_0(%arg0: i32) -> (i32, i32) {
    %c0_i32 = arith.constant 0 : i32
    %c0_i32_0 = arith.constant 0 : i32
    return %arg0, %c0_i32 : i32, i32
  }
  func.func @transform_1(%arg0: i32) -> (i32, i32) {
    %c0_i32 = arith.constant 0 : i32
    %c0_i32_0 = arith.constant 0 : i32
    %c0_i32_1 = arith.constant 0 : i32
    return %c0_i32, %c0_i32_0 : i32, i32
  }
  func.func @transform_2(%arg0: i32) -> (i32, i32) {
    %c0_i32 = arith.constant 0 : i32
    %c0_i32_0 = arith.constant 0 : i32
    %c0_i32_1 = arith.constant 0 : i32
    return %c0_i32, %c0_i32_0 : i32, i32
  }
  func.func @transform_3(%arg0: i32) -> (i32, i32) {
    %c0_i32 = arith.constant 0 : i32
    %c0_i32_0 = arith.constant 0 : i32
    %c0_i32_1 = arith.constant 0 : i32
    return %c0_i32, %c0_i32_0 : i32, i32
  }
  func.func @transform_4(%arg0: i32) -> (i32, i32) {
    %c0_i32 = arith.constant 0 : i32
    %c0_i32_0 = arith.constant 0 : i32
    %c0_i32_1 = arith.constant 0 : i32
    return %c0_i32, %c0_i32_0 : i32, i32
  }
  func.func @transform_5(%arg0: i32) -> (i32, i32, i32) {
    %c0_i32 = arith.constant 0 : i32
    %c0_i32_0 = arith.constant 0 : i32
    %c0_i32_1 = arith.constant 0 : i32
    return %arg0, %c0_i32, %c0_i32_0 : i32, i32, i32
  }
}

</mosaic_0001>

<llo_original>
// kernel: tpu_custom_call.1
$region0: #{tpu_custom_call.1}
  #allocation0 [shape = 'u32[]', space=smem, size = 0x4, offset = 0x4, fixed_abs, tag = 'smem constant byte address 0x4 - core index']
  #allocation1 [shape = 'u32[72,128]{1,0:T(1,128)}', space=vmem, size = 0x9000, scoped, tag = 'internal scratch']
  #allocation2 [shape = 'f32[1,1]{1,0:T(1,128)S(6)}', space=smem, size = 0x200, scoped, tag = 'scoped memory for tpu_custom_call.1']
  %s0 = inlined_call_operand.vmem [shape: bf16[128,64], index: 0, kind: input, shape index: {}]
  %s1 = inlined_call_operand.vmem [shape: bf16[64,32], index: 1, kind: input, shape index: {}]
  %s2 = inlined_call_operand.vmem [shape: f32[1,32], index: 2, kind: input, shape index: {}]
  %s3 = inlined_call_operand.vmem [shape: f32[1,32], index: 3, kind: input, shape index: {}]
  %s4 = inlined_call_operand.<no memory space> [shape: f32[1,1], index: 4, kind: input, shape index: {}]
  %s5 = inlined_call_operand.hbm [shape: f32[1,1,128], index: 5, kind: output, shape index: {}]
  %s6 = sld [smem:[#allocation0]]
  $region30: #{tpu_custom_call.1} parent=0
    _
  %s8 = ssub.s32 1, %s6
  %s9 = scalar_select 0, %s8, %s6
  %10 = sst [smem:[#allocation2]] %s4
  $region1: #{tpu_custom_call.1} parent=0
    #allocation3 [shape = 'u8[512]{0}', space=vmem, size = 0x400, scoped, tag = 'output window, operand 0, single buffered']
    #allocation4 [shape = 's32[1]{0}', space=sflag, size = 0x4, scoped, tag = 'scoped memory for tpu_custom_call.1']
    %11 = vsyncpa [#allocation4], 0
    // Predicated region
    $region2: #{tpu_custom_call.1} parent=1 // pred_check
      _
    $region3: #{tpu_custom_call.1} parent=1 // pred_check_branch
      %13 = sbr.rel (0) target = $region5
    $region4: #{tpu_custom_call.1} parent=1 // pred_region
      _
    $region5: #{tpu_custom_call.1} parent=1 // pred_fallthru
      _
    // Predicated region
    $region6: #{tpu_custom_call.1} parent=1 // pred_check
      _
    $region7: #{tpu_custom_call.1} parent=1 // pred_check_branch
      %15 = sbr.rel (0) target = $region9
    $region8: #{tpu_custom_call.1} parent=1 // pred_region
      _
    $region9: #{tpu_custom_call.1} parent=1 // pred_fallthru
      _
    // Predicated region
    $region10: #{tpu_custom_call.1} parent=1 // pred_check
      _
    $region11: #{tpu_custom_call.1} parent=1 // pred_check_branch
      %17 = sbr.rel (0) target = $region13
    $region12: #{tpu_custom_call.1} parent=1 // pred_region
      _
    $region13: #{tpu_custom_call.1} parent=1 // pred_fallthru
      _
    // Predicated region
    $region14: #{tpu_custom_call.1} parent=1 // pred_check
      _
    $region15: #{tpu_custom_call.1} parent=1 // pred_check_branch
      %19 = sbr.rel (0) target = $region17
    $region16: #{tpu_custom_call.1} parent=1 // pred_region
      _
    $region17: #{tpu_custom_call.1} parent=1 // pred_fallthru
      _
    // Predicated region
    $region18: #{tpu_custom_call.1} parent=1 // pred_check
      _
    $region19: #{tpu_custom_call.1} parent=1 // pred_check_branch
      %21 = sbr.rel (0) target = $region21
    $region20: #{tpu_custom_call.1} parent=1 // pred_region
      _
    $region21: #{tpu_custom_call.1} parent=1 // pred_fallthru
      _
    %v23 = vld [vmem:[%s0] sm:$0xf]
    %v24 = vld [vmem:[%s0 + $0x4] sm:$0xf]
    %v25 = vld [vmem:[%s0 + $0x8] sm:$0xf]
    %v26 = vld [vmem:[%s0 + $0xc] sm:$0xf]
    %v27 = vld [vmem:[%s0 + $0x10] sm:$0xf]
    %v28 = vld [vmem:[%s0 + $0x14] sm:$0xf]
    %v29 = vld [vmem:[%s0 + $0x18] sm:$0xf]
    %v30 = vld [vmem:[%s0 + $0x1c] sm:$0xf]
    %v31 = vld [vmem:[%s0 + $0x20] sm:$0xf]
    %v32 = vld [vmem:[%s0 + $0x24] sm:$0xf]
    %v33 = vld [vmem:[%s0 + $0x28] sm:$0xf]
    %v34 = vld [vmem:[%s0 + $0x2c] sm:$0xf]
    %v35 = vld [vmem:[%s0 + $0x30] sm:$0xf]
    %v36 = vld [vmem:[%s0 + $0x34] sm:$0xf]
    %v37 = vld [vmem:[%s0 + $0x38] sm:$0xf]
    %v38 = vld [vmem:[%s0 + $0x3c] sm:$0xf]
    %v39 = vld [vmem:[%s1] sm:$0xf]
    %v40 = vld [vmem:[%s1 + $0x4] sm:$0xf]
    %v41 = vld [vmem:[%s1 + $0x8] sm:$0xf]
    %v42 = vld [vmem:[%s1 + $0xc] sm:$0xf]
    %v43 = vld [vmem:[%s1 + $0x10] sm:$0xf]
    %v44 = vld [vmem:[%s1 + $0x14] sm:$0xf]
    %v45 = vld [vmem:[%s1 + $0x18] sm:$0xf]
    %v46 = vld [vmem:[%s1 + $0x1c] sm:$0xf]
    %v47 = vld [vmem:[%s2] sm:$0x1]
    %v49 = vperm.slane %v47, 0
    %v67 = vunpack.c.l.b16 %v23
    %v68 = vunpack.c.l.b16 %v24
    %v69 = vunpack.c.l.b16 %v25
    %v70 = vunpack.c.l.b16 %v26
    %v71 = vunpack.c.l.b16 %v27
    %v72 = vunpack.c.l.b16 %v28
    %v73 = vunpack.c.l.b16 %v29
    %v74 = vunpack.c.l.b16 %v30
    %v75 = vunpack.c.l.b16 %v31
    %v76 = vunpack.c.l.b16 %v32
    %v77 = vunpack.c.l.b16 %v33
    %v78 = vunpack.c.l.b16 %v34
    %v79 = vunpack.c.l.b16 %v35
    %v80 = vunpack.c.l.b16 %v36
    %v81 = vunpack.c.l.b16 %v37
    %v82 = vunpack.c.l.b16 %v38
    %v83 = vpack.c.b16 %v68, %v67
    %v84 = vpack.c.b16 %v70, %v69
    %v85 = vpack.c.b16 %v72, %v71
    %v86 = vpack.c.b16 %v74, %v73
    %v87 = vpack.c.b16 %v76, %v75
    %v88 = vpack.c.b16 %v78, %v77
    %v89 = vpack.c.b16 %v80, %v79
    %v90 = vpack.c.b16 %v82, %v81
    %v99 = vunpack.c.l.b16 %v39
    %v100 = vunpack.c.l.b16 %v40
    %v101 = vunpack.c.l.b16 %v41
    %v102 = vunpack.c.l.b16 %v42
    %v103 = vunpack.c.l.b16 %v43
    %v104 = vunpack.c.l.b16 %v44
    %v105 = vunpack.c.l.b16 %v45
    %v106 = vunpack.c.l.b16 %v46
    %v107 = vpack.c.b16 %v100, %v99
    %v108 = vpack.c.b16 %v102, %v101
    %v109 = vpack.c.b16 %v104, %v103
    %v110 = vpack.c.b16 %v106, %v105
    %vm115 = vcmask 523264
    %v117 = vsel %vm115, %v83, 0
    %v120 = vsel %vm115, %v84, 0
    %v123 = vsel %vm115, %v85, 0
    %v126 = vsel %vm115, %v86, 0
    %v129 = vsel %vm115, %v87, 0
    %v132 = vsel %vm115, %v88, 0
    %v135 = vsel %vm115, %v89, 0
    %v138 = vsel %vm115, %v90, 0
    %140 = vmatpush.bf16.msra.mxu0 0
    %141 = vmatpush.bf16.msra.mxu0 0
    %142 = vmatpush.bf16.msra.mxu0 0
    %143 = vmatpush.bf16.msra.mxu0 0
    %144 = vmatpush.bf16.msra.mxu0 %v110
    %145 = vmatpush.bf16.msra.mxu0 %v109
    %146 = vmatpush.bf16.msra.mxu0 %v108
    %147 = vmatpush.bf16.msra.mxu0 %v107
    %148 = vmatmul.bf16.gmra.mxu0 %v117
    %v149 = vpop.f32.mrf.mxu0
    %v150 = vadd.f32 %v49, %v149
    %v151 = vpop.f32.mrf.mxu0
    %v152 = vadd.f32 %v49, %v151
    %153 = vmatmul.bf16.gmra.mxu0 %v120
    %v154 = vpop.f32.mrf.mxu0
    %v155 = vadd.f32 %v49, %v154
    %v156 = vpop.f32.mrf.mxu0
    %v157 = vadd.f32 %v49, %v156
    %158 = vmatmul.bf16.gmra.mxu0 %v123
    %v159 = vpop.f32.mrf.mxu0
    %v160 = vadd.f32 %v49, %v159
    %v161 = vpop.f32.mrf.mxu0
    %v162 = vadd.f32 %v49, %v161
    %163 = vmatmul.bf16.gmra.mxu0 %v126
    %v164 = vpop.f32.mrf.mxu0
    %v165 = vadd.f32 %v49, %v164
    %v166 = vpop.f32.mrf.mxu0
    %v167 = vadd.f32 %v49, %v166
    %168 = vmatmul.bf16.gmra.mxu0 %v129
    %v169 = vpop.f32.mrf.mxu0
    %v170 = vadd.f32 %v49, %v169
    %v171 = vpop.f32.mrf.mxu0
    %v172 = vadd.f32 %v49, %v171
    %173 = vmatmul.bf16.gmra.mxu0 %v132
    %v174 = vpop.f32.mrf.mxu0
    %v175 = vadd.f32 %v49, %v174
    %v176 = vpop.f32.mrf.mxu0
    %v177 = vadd.f32 %v49, %v176
    %178 = vmatmul.bf16.gmra.mxu0 %v135
    %v179 = vpop.f32.mrf.mxu0
    %v180 = vadd.f32 %v49, %v179
    %v181 = vpop.f32.mrf.mxu0
    %v182 = vadd.f32 %v49, %v181
    %183 = vmatmul.bf16.gmra.mxu0 %v138
    %v184 = vpop.f32.mrf.mxu0
    %v185 = vadd.f32 %v49, %v184
    %v186 = vpop.f32.mrf.mxu0
    %v187 = vadd.f32 %v49, %v186
    %188 = vdwg.mxu0
    %v189 = vtanh.pop %v150
    %v190 = vtanh.pop %v152
    %v191 = vtanh.pop %v155
    %v192 = vtanh.pop %v157
    %v193 = vtanh.pop %v160
    %v194 = vtanh.pop %v162
    %v195 = vtanh.pop %v165
    %v196 = vtanh.pop %v167
    %v197 = vtanh.pop %v170
    %v198 = vtanh.pop %v172
    %v199 = vtanh.pop %v175
    %v200 = vtanh.pop %v177
    %v201 = vtanh.pop %v180
    %v202 = vtanh.pop %v182
    %v203 = vtanh.pop %v185
    %v204 = vtanh.pop %v187
    %v205 = vld [vmem:[%s3] sm:$0x1]
    %s206 = sld [smem:[#allocation2]]
    %v207 = vstv %s206
    %vm208 = vcmask 261120
    %v210 = vsel %vm208, %v205, 0
    %v213 = vsel %vm208, %v189, 0
    %v216 = vsel %vm208, %v190, 0
    %v219 = vsel %vm208, %v191, 0
    %v222 = vsel %vm208, %v192, 0
    %v225 = vsel %vm208, %v193, 0
    %v228 = vsel %vm208, %v194, 0
    %v231 = vsel %vm208, %v195, 0
    %v234 = vsel %vm208, %v196, 0
    %v237 = vsel %vm208, %v197, 0
    %v240 = vsel %vm208, %v198, 0
    %v243 = vsel %vm208, %v199, 0
    %v246 = vsel %vm208, %v200, 0
    %v249 = vsel %vm208, %v201, 0
    %v252 = vsel %vm208, %v202, 0
    %v255 = vsel %vm208, %v203, 0
    %v258 = vsel %vm208, %v204, 0
    %260 = vmatpush.xpose.msra.mxu0 %v258
    %261 = vmatpush.xpose.msra.mxu0 %v255
    %262 = vmatpush.xpose.msra.mxu0 %v252
    %263 = vmatpush.xpose.msra.mxu0 %v249
    %264 = vmatpush.xpose.msra.mxu0 %v246
    %265 = vmatpush.xpose.msra.mxu0 %v243
    %266 = vmatpush.xpose.msra.mxu0 %v240
    %267 = vmatpush.xpose.msra.mxu0 %v237
    %268 = vmatpush.xpose.msra.mxu0 %v234
    %269 = vmatpush.xpose.msra.mxu0 %v231
    %270 = vmatpush.xpose.msra.mxu0 %v228
    %271 = vmatpush.xpose.msra.mxu0 %v225
    %272 = vmatpush.xpose.msra.mxu0 %v222
    %273 = vmatpush.xpose.msra.mxu0 %v219
    %274 = vmatpush.xpose.msra.mxu0 %v216
    %275 = vmatpush.xpose.msra.mxu0 %v213
    %276 = vmatmul.f32.gmra.mxu0 %v210
    %v277 = vpop.f32.mrf.mxu0
    %v278 = vadd.f32 %v207, %v277
    %279 = vdwg.mxu0
    %280 = vst [vmem:[#allocation3] sm:$0x1] %v278
    // Predicated region
    $region22: #{tpu_custom_call.1} parent=1 // pred_check
      _
    $region23: #{tpu_custom_call.1} parent=1 // pred_check_branch
      %282 = sbr.rel (0) target = $region25
    $region24: #{tpu_custom_call.1} parent=1 // pred_region
      %284 = vsyncadd [#allocation4], 0
      %s286 = sshll.u32 [#allocation3], 4
      %s287 = int_to_ptr.vmem [resolvable:$true] %s286
      %s288 = sshll.u32 %s5, 4
      %s289 = int_to_ptr.hbm [resolvable:$true] %s288
      %291 = dma.vmem_to_hbm [thread:$0]  %s287, 16, %s289, [#allocation4]
    $region25: #{tpu_custom_call.1} parent=1 // pred_fallthru
      _
    // Predicated region
    $region26: #{tpu_custom_call.1} parent=1 // pred_check
      _
    $region27: #{tpu_custom_call.1} parent=1 // pred_check_branch
      %293 = sbr.rel (0) target = $region29
    $region28: #{tpu_custom_call.1} parent=1 // pred_region
      %295 = dma.done [#allocation4], 16
    $region29: #{tpu_custom_call.1} parent=1 // pred_fallthru
      _
    %296 = vsyncpa [#allocation4], 1

</llo_original>
